<compile_context>
chip_gen: v6e
topology: v6e:2x2x1
jax: 0.10.0
libtpu: 0.0.40
codegen_flags: <defaults>
</compile_context>

<pallas_src>
import jax
import jax.numpy as jnp
from jax.experimental import pallas as pl
from jax.experimental.pallas import tpu as pltpu

LANE = 128     # lane width of a vreg
SUBLANE = 8    # f32 sublane count


def _round_up(v, m):
    return (v + m - 1) // m * m


def _fused_gnn_kernel(a_ref, x_ref, w1_ref, b1_ref, w2_ref, b2_ref, o_ref):
    """Fused two-layer SAGEConv.

    a_ref:  [N, N]       row-normalized adjacency (compute dtype)
    x_ref:  [N, HP]      node features, lane-padded (compute dtype)
    w*_ref: [2*HP, HP]   stacked [W_l; W_r], pre-transposed for X @ W
    b*_ref: [1, HP]      bias (f32)
    o_ref:  [N, HP]      output (f32)
    """
    a = a_ref[...]
    x = x_ref[...]
    cdt = x.dtype  # MXU operand dtype (f32 or bf16); accumulation is always f32

    # ---------------- layer 1: h = relu((A @ X) @ Wl + X @ Wr + b1) ----------
    agg1 = jnp.dot(a, x, preferred_element_type=jnp.float32)
    cat1 = jnp.concatenate([agg1.astype(cdt), x], axis=1)            # [N, 2*HP]
    h = jnp.dot(cat1, w1_ref[...], preferred_element_type=jnp.float32)
    h = jnp.maximum(h + b1_ref[...], 0.0)                            # f32 epilogue
    h_c = h.astype(cdt)

    # ---------------- layer 2: out = (A @ h) @ Wl + h @ Wr + b2 --------------
    agg2 = jnp.dot(a, h_c, preferred_element_type=jnp.float32)
    cat2 = jnp.concatenate([agg2.astype(cdt), h_c], axis=1)          # [N, 2*HP]
    out = jnp.dot(cat2, w2_ref[...], preferred_element_type=jnp.float32)
    out = out + b2_ref[...]

    o_ref[...] = out.astype(o_ref.dtype)


def _stack_and_pad_weights(w_l, w_r, hp):
    """[[W_l];[W_r]] placed inside a zero [2*HP, HP] slab (lane/K padding)."""
    h_in, h_out = w_l.shape
    w = jnp.zeros((2 * hp, hp), jnp.float32)
    w = w.at[:h_in, :h_out].set(w_l)
    w = w.at[hp:hp + h_in, :h_out].set(w_r)
    return w


def _pad_bias(b, hp):
    return jnp.zeros((1, hp), jnp.float32).at[:, : b.shape[1]].set(b)


def build_mean_adjacency(edge_index, num_nodes):
    """Row-normalized adjacency: A[i, j] = (# edges j->i) / deg_in(i).

    Matches PyG scatter-mean over incoming messages (isolated nodes -> 0 row).
    Plain-JAX glue; see TODO(synk) above for the O(E) CSR-gather path.
    """
    src = edge_index[0]
    dst = edge_index[1]
    a = jnp.zeros((num_nodes, num_nodes), jnp.float32).at[dst, src].add(1.0)
    deg = jnp.sum(a, axis=1, keepdims=True)
    return a / jnp.maximum(deg, 1.0)


def gnn_forward(x, edge_index, params, *, compute_dtype=jnp.float32):
    n, h = x.shape
    hp = _round_up(h, LANE)        # lane-dense hidden dim
    npad = _round_up(n, SUBLANE)   # sublane-aligned node count

    a_norm = build_mean_adjacency(edge_index, n)
    a_pad = jnp.zeros((npad, npad), jnp.float32).at[:n, :n].set(a_norm)
    x_pad = jnp.zeros((npad, hp), jnp.float32).at[:n, :h].set(x)

    w1 = _stack_and_pad_weights(params["w_l1"], params["w_r1"], hp)
    w2 = _stack_and_pad_weights(params["w_l2"], params["w_r2"], hp)
    b1 = _pad_bias(params["b_l1"], hp)
    b2 = _pad_bias(params["b_l2"], hp)

    # MXU operands in compute_dtype (bf16 recommended on v6e/v7x); f32 accum.
    a_c = a_pad.astype(compute_dtype)
    x_c = x_pad.astype(compute_dtype)
    w1_c = w1.astype(compute_dtype)
    w2_c = w2.astype(compute_dtype)

    itemsize = jnp.dtype(compute_dtype).itemsize
    flops = 2 * (2 * npad * npad * hp + 2 * npad * (2 * hp) * hp)
    bytes_accessed = (
        (a_c.size + x_c.size + w1_c.size + w2_c.size) * itemsize
        + (b1.size + b2.size + npad * hp) * 4
    )

    out = pl.pallas_call(
        _fused_gnn_kernel,
        out_shape=jax.ShapeDtypeStruct((npad, hp), jnp.float32),
        in_specs=[
            pl.BlockSpec((npad, npad), lambda: (0, 0)),
            pl.BlockSpec((npad, hp), lambda: (0, 0)),
            pl.BlockSpec((2 * hp, hp), lambda: (0, 0)),
            pl.BlockSpec((1, hp), lambda: (0, 0)),
            pl.BlockSpec((2 * hp, hp), lambda: (0, 0)),
            pl.BlockSpec((1, hp), lambda: (0, 0)),
        ],
        out_specs=pl.BlockSpec((npad, hp), lambda: (0, 0)),
        compiler_params=pltpu.CompilerParams(dimension_semantics=()),
        cost_estimate=pl.CostEstimate(
            flops=flops, transcendentals=0, bytes_accessed=bytes_accessed
        ),
    )(a_c, x_c, w1_c, b1, w2_c, b2)

    return out[:n, :h]


def gnn_reference(x, edge_index, params):
    """Pure-JAX reference mirroring PyG SAGEConv semantics."""
    n = x.shape[0]
    a_norm = build_mean_adjacency(edge_index, n)

    def layer(h, w_l, w_r, b_l):
        agg = a_norm @ h
        return agg @ w_l + h @ w_r + b_l

    h = jax.nn.relu(layer(x, params["w_l1"], params["w_r1"], params["b_l1"]))
    return layer(h, params["w_l2"], params["w_r2"], params["b_l2"])


def init_params(key, hidden):
    ks = jax.random.split(key, 4)
    scale = 1.0 / jnp.sqrt(hidden)
    # Stored as [in, out] (transposed vs. torch Linear weight) for X @ W.
    return {
        "w_l1": jax.random.uniform(ks[0], (hidden, hidden), jnp.float32, -scale, scale),
        "w_r1": jax.random.uniform(ks[1], (hidden, hidden), jnp.float32, -scale, scale),
        "b_l1": jnp.zeros((1, hidden), jnp.float32),
        "w_l2": jax.random.uniform(ks[2], (hidden, hidden), jnp.float32, -scale, scale),
        "w_r2": jax.random.uniform(ks[3], (hidden, hidden), jnp.float32, -scale, scale),
        "b_l2": jnp.full((1, hidden), 0.01, jnp.float32),
    }


if __name__ == "__main__":
    key = jax.random.PRNGKey(0)
    k_x, k_e, k_p = jax.random.split(key, 3)

    num_nodes = 64
    hidden = 32
    num_edges = 256

    x = jax.random.normal(k_x, (num_nodes, hidden), jnp.float32)
    edge_index = jax.random.randint(k_e, (2, num_edges), 0, num_nodes, jnp.int32)
    params = init_params(k_p, hidden)

    ref = jax.block_until_ready(gnn_reference(x, edge_index, params))

    # Exact f32 path (tight tolerance).
    out_f32 = jax.block_until_ready(gnn_forward(x, edge_index, params))
    assert out_f32.shape == (num_nodes, hidden)
    assert jnp.allclose(out_f32, ref, atol=1e-4, rtol=1e-4)

    # bf16 MXU operands / f32 accumulation path (v6e/v7x-friendly), looser tol.
    out_bf16 = jax.block_until_ready(
        gnn_forward(x, edge_index, params, compute_dtype=jnp.bfloat16)
    )
    assert out_bf16.shape == (num_nodes, hidden)
    assert jnp.allclose(out_bf16, ref, atol=5e-2, rtol=5e-2)

    print("KERNEL_OK")
</pallas_src>

<mosaic_0001>
module attributes {stable_mosaic.version = 11 : i64} {
  func.func @_fused_gnn_kernel(%arg0: memref<64x64xf32, #tpu.memory_space<vmem>>, %arg1: memref<64x128xf32, #tpu.memory_space<vmem>>, %arg2: memref<256x128xf32, #tpu.memory_space<vmem>>, %arg3: memref<1x128xf32, #tpu.memory_space<vmem>>, %arg4: memref<256x128xf32, #tpu.memory_space<vmem>>, %arg5: memref<1x128xf32, #tpu.memory_space<vmem>>, %arg6: memref<64x128xf32, #tpu.memory_space<vmem>>) attributes {dimension_semantics = [], scalar_prefetch = 0 : i64, scratch_operands = 0 : i64, tpu.core_type = #tpu.core_type<tc>} {
    %c0 = arith.constant 0 : index
    %c0_0 = arith.constant 0 : index
    %0 = vector.load %arg0[%c0, %c0_0] : memref<64x64xf32, #tpu.memory_space<vmem>>, vector<64x64xf32>
    %c0_1 = arith.constant 0 : index
    %c0_2 = arith.constant 0 : index
    %1 = vector.load %arg1[%c0_1, %c0_2] : memref<64x128xf32, #tpu.memory_space<vmem>>, vector<64x128xf32>
    %cst = arith.constant dense<0.000000e+00> : vector<64x128xf32>
    %2 = tpu.matmul %0, %1, %cst {dimension_numbers = #tpu.dot_dimension_numbers<[1], [0], [0], [1], [0, 0, 1, 1], [], []>} : vector<64x64xf32>, vector<64x128xf32>, vector<64x128xf32> -> vector<64x128xf32>
    %3 = tpu.concatenate %2, %1 in 1 : vector<64x128xf32>, vector<64x128xf32> -> vector<64x256xf32>
    %c0_3 = arith.constant 0 : index
    %c0_4 = arith.constant 0 : index
    %4 = vector.load %arg2[%c0_3, %c0_4] : memref<256x128xf32, #tpu.memory_space<vmem>>, vector<256x128xf32>
    %cst_5 = arith.constant dense<0.000000e+00> : vector<64x128xf32>
    %5 = tpu.matmul %3, %4, %cst_5 {dimension_numbers = #tpu.dot_dimension_numbers<[1], [0], [0], [1], [0, 0, 1, 1], [], []>} : vector<64x256xf32>, vector<256x128xf32>, vector<64x128xf32> -> vector<64x128xf32>
    %c0_6 = arith.constant 0 : index
    %c0_7 = arith.constant 0 : index
    %6 = vector.load %arg3[%c0_6, %c0_7] : memref<1x128xf32, #tpu.memory_space<vmem>>, vector<1x128xf32>
    %7 = vector.broadcast %6 : vector<1x128xf32> to vector<64x128xf32>
    %8 = arith.addf %5, %7 : vector<64x128xf32>
    %cst_8 = arith.constant 0.000000e+00 : f32
    %9 = vector.broadcast %cst_8 : f32 to vector<64x128xf32>
    %10 = arith.maximumf %8, %9 : vector<64x128xf32>
    %cst_9 = arith.constant dense<0.000000e+00> : vector<64x128xf32>
    %11 = tpu.matmul %0, %10, %cst_9 {dimension_numbers = #tpu.dot_dimension_numbers<[1], [0], [0], [1], [0, 0, 1, 1], [], []>} : vector<64x64xf32>, vector<64x128xf32>, vector<64x128xf32> -> vector<64x128xf32>
    %12 = tpu.concatenate %11, %10 in 1 : vector<64x128xf32>, vector<64x128xf32> -> vector<64x256xf32>
    %c0_10 = arith.constant 0 : index
    %c0_11 = arith.constant 0 : index
    %13 = vector.load %arg4[%c0_10, %c0_11] : memref<256x128xf32, #tpu.memory_space<vmem>>, vector<256x128xf32>
    %cst_12 = arith.constant dense<0.000000e+00> : vector<64x128xf32>
    %14 = tpu.matmul %12, %13, %cst_12 {dimension_numbers = #tpu.dot_dimension_numbers<[1], [0], [0], [1], [0, 0, 1, 1], [], []>} : vector<64x256xf32>, vector<256x128xf32>, vector<64x128xf32> -> vector<64x128xf32>
    %c0_13 = arith.constant 0 : index
    %c0_14 = arith.constant 0 : index
    %15 = vector.load %arg5[%c0_13, %c0_14] : memref<1x128xf32, #tpu.memory_space<vmem>>, vector<1x128xf32>
    %16 = vector.broadcast %15 : vector<1x128xf32> to vector<64x128xf32>
    %17 = arith.addf %14, %16 : vector<64x128xf32>
    %c0_15 = arith.constant 0 : index
    %c0_16 = arith.constant 0 : index
    %18 = vector.load %arg6[%c0_15, %c0_16] : memref<64x128xf32, #tpu.memory_space<vmem>>, vector<64x128xf32>
    tpu.vector_store %arg6[%c0_15, %c0_16], %17 {strides = array<i32>} : memref<64x128xf32, #tpu.memory_space<vmem>>, vector<64x128xf32>,
    return
  }
}

</mosaic_0001>

<llo_original>
// kernel: tpu_custom_call.1
$region0: #{tpu_custom_call.1}
  #allocation0 [shape = 'u32[]', space=smem, size = 0x4, offset = 0x4, fixed_abs, tag = 'smem constant byte address 0x4 - core index']
  #allocation1 [shape = 'u32[144,128]{1,0:T(1,128)}', space=vmem, size = 0x12000, scoped, tag = 'internal scratch']
  %s0 = inlined_call_operand.hbm [shape: f32[64,64], index: 0, kind: input, shape index: {}]
  %s1 = inlined_call_operand.hbm [shape: f32[64,128], index: 1, kind: input, shape index: {}]
  %s2 = inlined_call_operand.hbm [shape: f32[256,128], index: 2, kind: input, shape index: {}]
  %s3 = inlined_call_operand.vmem [shape: f32[1,128], index: 3, kind: input, shape index: {}]
  %s4 = inlined_call_operand.hbm [shape: f32[256,128], index: 4, kind: input, shape index: {}]
  %s5 = inlined_call_operand.vmem [shape: f32[1,128], index: 5, kind: input, shape index: {}]
  %s6 = inlined_call_operand.hbm [shape: f32[64,128], index: 6, kind: output, shape index: {}]
  %s7 = sld [smem:[#allocation0]]
  $region50: #{tpu_custom_call.1} parent=0
    _
  %s9 = ssub.s32 1, %s7
  %s10 = scalar_select 0, %s9, %s7
  $region1: #{tpu_custom_call.1} parent=0
    #allocation2 [shape = 'u8[32768]{0}', space=vmem, size = 0x8000, scoped, tag = 'input window, operand 0, single buffered']
    #allocation3 [shape = 's32[1]{0}', space=sflag, size = 0x4, scoped, tag = 'scoped memory for tpu_custom_call.1']
    #allocation4 [shape = 's32[1]{0}', space=sflag, size = 0x4, scoped, tag = 'scoped memory for tpu_custom_call.1']
    #allocation5 [shape = 'u8[32768]{0}', space=vmem, size = 0x8000, scoped, tag = 'input window, operand 1, single buffered']
    #allocation6 [shape = 's32[1]{0}', space=sflag, size = 0x4, scoped, tag = 'scoped memory for tpu_custom_call.1']
    #allocation7 [shape = 'u8[131072]{0}', space=vmem, size = 0x20000, scoped, tag = 'input window, operand 2, single buffered']
    #allocation8 [shape = 'u8[131072]{0}', space=vmem, size = 0x20000, scoped, tag = 'input window, operand 4, single buffered']
    #allocation9 [shape = 's32[1]{0}', space=sflag, size = 0x4, scoped, tag = 'scoped memory for tpu_custom_call.1']
    #allocation10 [shape = 'u8[32768]{0}', space=vmem, size = 0x8000, scoped, tag = 'output window, operand 0, single buffered']
    %11 = vsyncpa [#allocation3], 0
    %12 = vsyncpa [#allocation6], 0
    %13 = vsyncpa [#allocation9], 0
    %14 = vsyncpa [#allocation4], 0
    // Predicated region
    $region2: #{tpu_custom_call.1} parent=1 // pred_check
      _
    $region3: #{tpu_custom_call.1} parent=1 // pred_check_branch
      %16 = sbr.rel (0) target = $region5
    $region4: #{tpu_custom_call.1} parent=1 // pred_region
      %s18 = ssub.s32 1024, 1024
      %19 = vsyncadd [#allocation3], %s18
      %s20 = sshll.u32 [#allocation2], 4
      %s21 = int_to_ptr.vmem [resolvable:$true] %s20
      %26 = dma.hbm_to_vmem [thread:$0]  %s0, 1024, %s21, [#allocation3], 128, 128, 8
    $region5: #{tpu_custom_call.1} parent=1 // pred_fallthru
      _
    // Predicated region
    $region6: #{tpu_custom_call.1} parent=1 // pred_check
      _
    $region7: #{tpu_custom_call.1} parent=1 // pred_check_branch
      %28 = sbr.rel (0) target = $region9
    $region8: #{tpu_custom_call.1} parent=1 // pred_region
      %s30 = ssub.s32 1024, 1024
      %31 = vsyncadd [#allocation6], %s30
      %s32 = sshll.u32 [#allocation5], 4
      %s33 = int_to_ptr.vmem [resolvable:$true] %s32
      %38 = dma.hbm_to_vmem [thread:$0]  %s1, 1024, %s33, [#allocation6], 128, 128, 8
    $region9: #{tpu_custom_call.1} parent=1 // pred_fallthru
      _
    // Predicated region
    $region10: #{tpu_custom_call.1} parent=1 // pred_check
      _
    $region11: #{tpu_custom_call.1} parent=1 // pred_check_branch
      %40 = sbr.rel (0) target = $region13
    $region12: #{tpu_custom_call.1} parent=1 // pred_region
      %s42 = ssub.s32 4096, 4096
      %43 = vsyncadd [#allocation6], %s42
      %s44 = sshll.u32 [#allocation7], 4
      %s45 = int_to_ptr.vmem [resolvable:$true] %s44
      %50 = dma.hbm_to_vmem [thread:$0]  %s2, 4096, %s45, [#allocation6], 128, 128, 8
    $region13: #{tpu_custom_call.1} parent=1 // pred_fallthru
      _
    // Predicated region
    $region14: #{tpu_custom_call.1} parent=1 // pred_check
      _
    $region15: #{tpu_custom_call.1} parent=1 // pred_check_branch
      %52 = sbr.rel (0) target = $region17
    $region16: #{tpu_custom_call.1} parent=1 // pred_region
      _
    $region17: #{tpu_custom_call.1} parent=1 // pred_fallthru
      _
    // Predicated region
    $region18: #{tpu_custom_call.1} parent=1 // pred_check
      _
    $region19: #{tpu_custom_call.1} parent=1 // pred_check_branch
      %54 = sbr.rel (0) target = $region21
    $region20: #{tpu_custom_call.1} parent=1 // pred_region
      %s56 = ssub.s32 4096, 4096
      %57 = vsyncadd [#allocation9], %s56
      %s58 = sshll.u32 [#allocation8], 4
      %s59 = int_to_ptr.vmem [resolvable:$true] %s58
      %64 = dma.hbm_to_vmem [thread:$0]  %s4, 4096, %s59, [#allocation9], 128, 128, 8
    $region21: #{tpu_custom_call.1} parent=1 // pred_fallthru
      _
    // Predicated region
    $region22: #{tpu_custom_call.1} parent=1 // pred_check
      _
    $region23: #{tpu_custom_call.1} parent=1 // pred_check_branch
      %66 = sbr.rel (0) target = $region25
    $region24: #{tpu_custom_call.1} parent=1 // pred_region
      _
    $region25: #{tpu_custom_call.1} parent=1 // pred_fallthru
      _
    // Predicated region
    $region26: #{tpu_custom_call.1} parent=1 // pred_check
      _
    $region27: #{tpu_custom_call.1} parent=1 // pred_check_branch
      %68 = sbr.rel (0) target = $region29
    $region28: #{tpu_custom_call.1} parent=1 // pred_region
      %69 = dma.done [#allocation3], 1024
    $region29: #{tpu_custom_call.1} parent=1 // pred_fallthru
      _
    // Predicated region
    $region30: #{tpu_custom_call.1} parent=1 // pred_check
      _
    $region31: #{tpu_custom_call.1} parent=1 // pred_check_branch
      %71 = sbr.rel (0) target = $region33
    $region32: #{tpu_custom_call.1} parent=1 // pred_region
      %72 = dma.done [#allocation6], 1024
    $region33: #{tpu_custom_call.1} parent=1 // pred_fallthru
      _
    // Predicated region
    $region34: #{tpu_custom_call.1} parent=1 // pred_check
      _
    $region35: #{tpu_custom_call.1} parent=1 // pred_check_branch
      %74 = sbr.rel (0) target = $region37
    $region36: #{tpu_custom_call.1} parent=1 // pred_region
      %75 = dma.done [#allocation6], 4096
    $region37: #{tpu_custom_call.1} parent=1 // pred_fallthru
      _
    // Predicated region
    $region38: #{tpu_custom_call.1} parent=1 // pred_check
      _
    $region39: #{tpu_custom_call.1} parent=1 // pred_check_branch
      %77 = sbr.rel (0) target = $region41
    $region40: #{tpu_custom_call.1} parent=1 // pred_region
      %78 = dma.done [#allocation9], 4096
    $region41: #{tpu_custom_call.1} parent=1 // pred_fallthru
      _
    %v79 = vld [vmem:[#allocation2] sm:$0xff]
    %v80 = vld [vmem:[#allocation2 + $0x8] sm:$0xff]
    %v81 = vld [vmem:[#allocation2 + $0x10] sm:$0xff]
    %v82 = vld [vmem:[#allocation2 + $0x18] sm:$0xff]
    %v83 = vld [vmem:[#allocation2 + $0x20] sm:$0xff]
    %v84 = vld [vmem:[#allocation2 + $0x28] sm:$0xff]
    %v85 = vld [vmem:[#allocation2 + $0x30] sm:$0xff]
    %v86 = vld [vmem:[#allocation2 + $0x38] sm:$0xff]
    %v87 = vld [vmem:[#allocation5] sm:$0xff]
    %v88 = vld [vmem:[#allocation5 + $0x8] sm:$0xff]
    %v89 = vld [vmem:[#allocation5 + $0x10] sm:$0xff]
    %v90 = vld [vmem:[#allocation5 + $0x18] sm:$0xff]
    %v91 = vld [vmem:[#allocation5 + $0x20] sm:$0xff]
    %v92 = vld [vmem:[#allocation5 + $0x28] sm:$0xff]
    %v93 = vld [vmem:[#allocation5 + $0x30] sm:$0xff]
    %v94 = vld [vmem:[#allocation5 + $0x38] sm:$0xff]
    %vm95 = vcmask 523264
    %v97 = vsel %vm95, %v79, 0
    %v100 = vsel %vm95, %v80, 0
    %v103 = vsel %vm95, %v81, 0
    %v106 = vsel %vm95, %v82, 0
    %v109 = vsel %vm95, %v83, 0
    %v112 = vsel %vm95, %v84, 0
    %v115 = vsel %vm95, %v85, 0
    %v118 = vsel %vm95, %v86, 0
    %120 = vmatprep.subr.mxu0 0.0
    %121 = vmatpush1.msra.mxu0 0.0
    %122 = vmatprep.subr.mxu0 0.0
    %123 = vmatpush1.msra.mxu0 0.0
    %124 = vmatprep.subr.mxu0 0.0
    %125 = vmatpush1.msra.mxu0 0.0
    %126 = vmatprep.subr.mxu0 0.0
    %127 = vmatpush1.msra.mxu0 0.0
    %128 = vmatprep.subr.mxu0 0.0
    %129 = vmatpush1.msra.mxu0 0.0
    %130 = vmatprep.subr.mxu0 0.0
    %131 = vmatpush1.msra.mxu0 0.0
    %132 = vmatprep.subr.mxu0 0.0
    %133 = vmatpush1.msra.mxu0 0.0
    %134 = vmatprep.subr.mxu0 0.0
    %135 = vmatpush1.msra.mxu0 0.0
    %136 = vmatprep.subr.mxu0 0.0
    %137 = vmatpush1.msra.mxu0 %v94
    %138 = vmatprep.subr.mxu0 0.0
    %139 = vmatpush1.msra.mxu0 %v93
    %140 = vmatprep.subr.mxu0 0.0
    %141 = vmatpush1.msra.mxu0 %v92
    %142 = vmatprep.subr.mxu0 0.0
    %143 = vmatpush1.msra.mxu0 %v91
    %144 = vmatprep.subr.mxu0 0.0
    %145 = vmatpush1.msra.mxu0 %v90
    %146 = vmatprep.subr.mxu0 0.0
    %147 = vmatpush1.msra.mxu0 %v89
    %148 = vmatprep.subr.mxu0 0.0
    %149 = vmatpush1.msra.mxu0 %v88
    %150 = vmatprep.subr.mxu0 0.0
    %151 = vmatpush1.msra.mxu0 %v87
    %152 = vmatprep.subr.mxu0 0.0
    %153 = vmatpush2.msra.mxu0 0.0
    %154 = vmatprep.subr.mxu0 0.0
    %155 = vmatpush2.msra.mxu0 0.0
    %156 = vmatprep.subr.mxu0 0.0
    %157 = vmatpush2.msra.mxu0 0.0
    %158 = vmatprep.subr.mxu0 0.0
    %159 = vmatpush2.msra.mxu0 0.0
    %160 = vmatprep.subr.mxu0 0.0
    %161 = vmatpush2.msra.mxu0 0.0
    %162 = vmatprep.subr.mxu0 0.0
    %163 = vmatpush2.msra.mxu0 0.0
    %164 = vmatprep.subr.mxu0 0.0
    %165 = vmatpush2.msra.mxu0 0.0
    %166 = vmatprep.subr.mxu0 0.0
    %167 = vmatpush2.msra.mxu0 0.0
    %168 = vmatprep.subr.mxu0 0.0
    %169 = vmatpush2.msra.mxu0 0.0
    %170 = vmatprep.subr.mxu0 0.0
    %171 = vmatpush2.msra.mxu0 0.0
    %172 = vmatprep.subr.mxu0 0.0
    %173 = vmatpush2.msra.mxu0 0.0
    %174 = vmatprep.subr.mxu0 0.0
    %175 = vmatpush2.msra.mxu0 0.0
    %176 = vmatprep.subr.mxu0 0.0
    %177 = vmatpush2.msra.mxu0 0.0
    %178 = vmatprep.subr.mxu0 0.0
    %179 = vmatpush2.msra.mxu0 0.0
    %180 = vmatprep.subr.mxu0 0.0
    %181 = vmatpush2.msra.mxu0 0.0
    %182 = vmatprep.subr.mxu0 0.0
    %183 = vmatpush2.msra.mxu0 0.0
    %184 = vmatprep.mubr.f32.mxu0 0.0
    %185 = vmatmul.mubr.f32.gmra.mxu0 %v97
    %v186 = vpop.f32.mrf.mxu0
    %v187 = vadd.f32 0.0, %v186
    %v188 = vpop.f32.mrf.mxu0
    %189 = vmatprep.mubr.f32.mxu0 0.0
    %190 = vmatmul.mubr.f32.gmra.mxu0 %v100
    %v191 = vpop.f32.mrf.mxu0
    %v192 = vadd.f32 0.0, %v191
    %v193 = vpop.f32.mrf.mxu0
    %194 = vmatprep.mubr.f32.mxu0 0.0
    %195 = vmatmul.mubr.f32.gmra.mxu0 %v103
    %v196 = vpop.f32.mrf.mxu0
    %v197 = vadd.f32 0.0, %v196
    %v198 = vpop.f32.mrf.mxu0
    %199 = vmatprep.mubr.f32.mxu0 0.0
    %200 = vmatmul.mubr.f32.gmra.mxu0 %v106
    %v201 = vpop.f32.mrf.mxu0
    %v202 = vadd.f32 0.0, %v201
    %v203 = vpop.f32.mrf.mxu0
    %204 = vmatprep.mubr.f32.mxu0 0.0
    %205 = vmatmul.mubr.f32.gmra.mxu0 %v109
    %v206 = vpop.f32.mrf.mxu0
    %v207 = vadd.f32 0.0, %v206
    %v208 = vpop.f32.mrf.mxu0
    %209 = vmatprep.mubr.f32.mxu0 0.0
    %210 = vmatmul.mubr.f32.gmra.mxu0 %v112
    %v211 = vpop.f32.mrf.mxu0
    %v212 = vadd.f32 0.0, %v211
    %v213 = vpop.f32.mrf.mxu0
    %214 = vmatprep.mubr.f32.mxu0 0.0
    %215 = vmatmul.mubr.f32.gmra.mxu0 %v115
    %v216 = vpop.f32.mrf.mxu0
    %v217 = vadd.f32 0.0, %v216
    %v218 = vpop.f32.mrf.mxu0
    %219 = vmatprep.mubr.f32.mxu0 0.0
    %220 = vmatmul.mubr.f32.gmra.mxu0 %v118
    %v221 = vpop.f32.mrf.mxu0
    %v222 = vadd.f32 0.0, %v221
    %v223 = vpop.f32.mrf.mxu0
    %224 = vdwg.mxu0
    %v225 = vld [vmem:[#allocation7] sm:$0xff]
    %v226 = vld [vmem:[#allocation7 + $0x8] sm:$0xff]
    %v227 = vld [vmem:[#allocation7 + $0x10] sm:$0xff]
    %v228 = vld [vmem:[#allocation7 + $0x18] sm:$0xff]
    %v229 = vld [vmem:[#allocation7 + $0x20] sm:$0xff]
    %v230 = vld [vmem:[#allocation7 + $0x28] sm:$0xff]
    %v231 = vld [vmem:[#allocation7 + $0x30] sm:$0xff]
    %v232 = vld [vmem:[#allocation7 + $0x38] sm:$0xff]
    %v233 = vld [vmem:[#allocation7 + $0x40] sm:$0xff]
    %v234 = vld [vmem:[#allocation7 + $0x48] sm:$0xff]
    %v235 = vld [vmem:[#allocation7 + $0x50] sm:$0xff]
    %v236 = vld [vmem:[#allocation7 + $0x58] sm:$0xff]
    %v237 = vld [vmem:[#allocation7 + $0x60] sm:$0xff]
    %v238 = vld [vmem:[#allocation7 + $0x68] sm:$0xff]
    %v239 = vld [vmem:[#allocation7 + $0x70] sm:$0xff]
    %v240 = vld [vmem:[#allocation7 + $0x78] sm:$0xff]
    %v241 = vld [vmem:[#allocation7 + $0x80] sm:$0xff]
    %v242 = vld [vmem:[#allocation7 + $0x88] sm:$0xff]
    %v243 = vld [vmem:[#allocation7 + $0x90] sm:$0xff]
    %v244 = vld [vmem:[#allocation7 + $0x98] sm:$0xff]
    %v245 = vld [vmem:[#allocation7 + $0xa0] sm:$0xff]
    %v246 = vld [vmem:[#allocation7 + $0xa8] sm:$0xff]
    %v247 = vld [vmem:[#allocation7 + $0xb0] sm:$0xff]
    %v248 = vld [vmem:[#allocation7 + $0xb8] sm:$0xff]
    %v249 = vld [vmem:[#allocation7 + $0xc0] sm:$0xff]
    %v250 = vld [vmem:[#allocation7 + $0xc8] sm:$0xff]
    %v251 = vld [vmem:[#allocation7 + $0xd0] sm:$0xff]
    %v252 = vld [vmem:[#allocation7 + $0xd8] sm:$0xff]
    %v253 = vld [vmem:[#allocation7 + $0xe0] sm:$0xff]
    %v254 = vld [vmem:[#allocation7 + $0xe8] sm:$0xff]
    %v255 = vld [vmem:[#allocation7 + $0xf0] sm:$0xff]
    %v256 = vld [vmem:[#allocation7 + $0xf8] sm:$0xff]
    %v257 = vld [vmem:[%s3] sm:$0x1]
    %v259 = vlaneseq
    %v260 = vshrl.u32 %v259, 7
    %v261 = vsub.s32 0, %v260
    %v262 = vrot.slane %v257, %v261
    %264 = vmatprep.subr.mxu0 0.0
    %265 = vmatpush1.msra.mxu0 %v240
    %266 = vmatprep.subr.mxu0 0.0
    %267 = vmatpush1.msra.mxu0 %v239
    %268 = vmatprep.subr.mxu0 0.0
    %269 = vmatpush1.msra.mxu0 %v238
    %270 = vmatprep.subr.mxu0 0.0
    %271 = vmatpush1.msra.mxu0 %v237
    %272 = vmatprep.subr.mxu0 0.0
    %273 = vmatpush1.msra.mxu0 %v236
    %274 = vmatprep.subr.mxu0 0.0
    %275 = vmatpush1.msra.mxu0 %v235
    %276 = vmatprep.subr.mxu0 0.0
    %277 = vmatpush1.msra.mxu0 %v234
    %278 = vmatprep.subr.mxu0 0.0
    %279 = vmatpush1.msra.mxu0 %v233
    %280 = vmatprep.subr.mxu0 0.0
    %281 = vmatpush1.msra.mxu0 %v232
    %282 = vmatprep.subr.mxu0 0.0
    %283 = vmatpush1.msra.mxu0 %v231
    %284 = vmatprep.subr.mxu0 0.0
    %285 = vmatpush1.msra.mxu0 %v230
    %286 = vmatprep.subr.mxu0 0.0
    %287 = vmatpush1.msra.mxu0 %v229
    %288 = vmatprep.subr.mxu0 0.0
    %289 = vmatpush1.msra.mxu0 %v228
    %290 = vmatprep.subr.mxu0 0.0
    %291 = vmatpush1.msra.mxu0 %v227
    %292 = vmatprep.subr.mxu0 0.0
    %293 = vmatpush1.msra.mxu0 %v226
    %294 = vmatprep.subr.mxu0 0.0
    %295 = vmatpush1.msra.mxu0 %v225
    %296 = vmatprep.subr.mxu0 0.0
    %297 = vmatpush2.msra.mxu0 %v256
    %298 = vmatprep.subr.mxu0 0.0
    %299 = vmatpush2.msra.mxu0 %v255
    %300 = vmatprep.subr.mxu0 0.0
    %301 = vmatpush2.msra.mxu0 %v254
    %302 = vmatprep.subr.mxu0 0.0
    %303 = vmatpush2.msra.mxu0 %v253
    %304 = vmatprep.subr.mxu0 0.0
    %305 = vmatpush2.msra.mxu0 %v252
    %306 = vmatprep.subr.mxu0 0.0
    %307 = vmatpush2.msra.mxu0 %v251
    %308 = vmatprep.subr.mxu0 0.0
    %309 = vmatpush2.msra.mxu0 %v250
    %310 = vmatprep.subr.mxu0 0.0
    %311 = vmatpush2.msra.mxu0 %v249
    %312 = vmatprep.subr.mxu0 0.0
    %313 = vmatpush2.msra.mxu0 %v248
    %314 = vmatprep.subr.mxu0 0.0
    %315 = vmatpush2.msra.mxu0 %v247
    %316 = vmatprep.subr.mxu0 0.0
    %317 = vmatpush2.msra.mxu0 %v246
    %318 = vmatprep.subr.mxu0 0.0
    %319 = vmatpush2.msra.mxu0 %v245
    %320 = vmatprep.subr.mxu0 0.0
    %321 = vmatpush2.msra.mxu0 %v244
    %322 = vmatprep.subr.mxu0 0.0
    %323 = vmatpush2.msra.mxu0 %v243
    %324 = vmatprep.subr.mxu0 0.0
    %325 = vmatpush2.msra.mxu0 %v242
    %326 = vmatprep.subr.mxu0 0.0
    %327 = vmatpush2.msra.mxu0 %v241
    %328 = vmatprep.mubr.f32.mxu0 %v87
    %329 = vmatmul.mubr.f32.gmra.mxu0 %v187
    %v330 = vpop.f32.mrf.mxu0
    %v331 = vadd.f32 %v262, %v330
    %v332 = vpop.f32.mrf.mxu0
    %333 = vmatprep.mubr.f32.mxu0 %v88
    %334 = vmatmul.mubr.f32.gmra.mxu0 %v192
    %v335 = vpop.f32.mrf.mxu0
    %v336 = vadd.f32 %v262, %v335
    %v337 = vpop.f32.mrf.mxu0
    %338 = vmatprep.mubr.f32.mxu0 %v89
    %339 = vmatmul.mubr.f32.gmra.mxu0 %v197
    %v340 = vpop.f32.mrf.mxu0
    %v341 = vadd.f32 %v262, %v340
    %v342 = vpop.f32.mrf.mxu0
    %343 = vmatprep.mubr.f32.mxu0 %v90
    %344 = vmatmul.mubr.f32.gmra.mxu0 %v202
    %v345 = vpop.f32.mrf.mxu0
    %v346 = vadd.f32 %v262, %v345
    %v347 = vpop.f32.mrf.mxu0
    %348 = vmatprep.mubr.f32.mxu0 %v91
    %349 = vmatmul.mubr.f32.gmra.mxu0 %v207
    %v350 = vpop.f32.mrf.mxu0
    %v351 = vadd.f32 %v262, %v350
    %v352 = vpop.f32.mrf.mxu0
    %353 = vmatprep.mubr.f32.mxu0 %v92
    %354 = vmatmul.mubr.f32.gmra.mxu0 %v212
    %v355 = vpop.f32.mrf.mxu0
    %v356 = vadd.f32 %v262, %v355
    %v357 = vpop.f32.mrf.mxu0
    %358 = vmatprep.mubr.f32.mxu0 %v93
    %359 = vmatmul.mubr.f32.gmra.mxu0 %v217
    %v360 = vpop.f32.mrf.mxu0
    %v361 = vadd.f32 %v262, %v360
    %v362 = vpop.f32.mrf.mxu0
    %363 = vmatprep.mubr.f32.mxu0 %v94
    %364 = vmatmul.mubr.f32.gmra.mxu0 %v222
    %v365 = vpop.f32.mrf.mxu0
    %v366 = vadd.f32 %v262, %v365
    %v367 = vpop.f32.mrf.mxu0
    %368 = vdwg.mxu0
    %v369 = vmax.f32 %v331, 0.0
    %v370 = vmax.f32 %v336, 0.0
    %v371 = vmax.f32 %v341, 0.0
    %v372 = vmax.f32 %v346, 0.0
    %v373 = vmax.f32 %v351, 0.0
    %v374 = vmax.f32 %v356, 0.0
    %v375 = vmax.f32 %v361, 0.0
    %v376 = vmax.f32 %v366, 0.0
    %377 = vmatprep.subr.mxu0 0.0
    %378 = vmatpush1.msra.mxu0 0.0
    %379 = vmatprep.subr.mxu0 0.0
    %380 = vmatpush1.msra.mxu0 0.0
    %381 = vmatprep.subr.mxu0 0.0
    %382 = vmatpush1.msra.mxu0 0.0
    %383 = vmatprep.subr.mxu0 0.0
    %384 = vmatpush1.msra.mxu0 0.0
    %385 = vmatprep.subr.mxu0 0.0
    %386 = vmatpush1.msra.mxu0 0.0
    %387 = vmatprep.subr.mxu0 0.0
    %388 = vmatpush1.msra.mxu0 0.0
    %389 = vmatprep.subr.mxu0 0.0
    %390 = vmatpush1.msra.mxu0 0.0
    %391 = vmatprep.subr.mxu0 0.0
    %392 = vmatpush1.msra.mxu0 0.0
    %393 = vmatprep.subr.mxu0 0.0
    %394 = vmatpush1.msra.mxu0 %v376
    %395 = vmatprep.subr.mxu0 0.0
    %396 = vmatpush1.msra.mxu0 %v375
    %397 = vmatprep.subr.mxu0 0.0
    %398 = vmatpush1.msra.mxu0 %v374
    %399 = vmatprep.subr.mxu0 0.0
    %400 = vmatpush1.msra.mxu0 %v373
    %401 = vmatprep.subr.mxu0 0.0
    %402 = vmatpush1.msra.mxu0 %v372
    %403 = vmatprep.subr.mxu0 0.0
    %404 = vmatpush1.msra.mxu0 %v371
    %405 = vmatprep.subr.mxu0 0.0
    %406 = vmatpush1.msra.mxu0 %v370
    %407 = vmatprep.subr.mxu0 0.0
    %408 = vmatpush1.msra.mxu0 %v369
    %409 = vmatprep.subr.mxu0 0.0
    %410 = vmatpush2.msra.mxu0 0.0
    %411 = vmatprep.subr.mxu0 0.0
    %412 = vmatpush2.msra.mxu0 0.0
    %413 = vmatprep.subr.mxu0 0.0
    %414 = vmatpush2.msra.mxu0 0.0
    %415 = vmatprep.subr.mxu0 0.0
    %416 = vmatpush2.msra.mxu0 0.0
    %417 = vmatprep.subr.mxu0 0.0
    %418 = vmatpush2.msra.mxu0 0.0
    %419 = vmatprep.subr.mxu0 0.0
    %420 = vmatpush2.msra.mxu0 0.0
    %421 = vmatprep.subr.mxu0 0.0
    %422 = vmatpush2.msra.mxu0 0.0
    %423 = vmatprep.subr.mxu0 0.0
    %424 = vmatpush2.msra.mxu0 0.0
    %425 = vmatprep.subr.mxu0 0.0
    %426 = vmatpush2.msra.mxu0 0.0
    %427 = vmatprep.subr.mxu0 0.0
    %428 = vmatpush2.msra.mxu0 0.0
    %429 = vmatprep.subr.mxu0 0.0
    %430 = vmatpush2.msra.mxu0 0.0
    %431 = vmatprep.subr.mxu0 0.0
    %432 = vmatpush2.msra.mxu0 0.0
    %433 = vmatprep.subr.mxu0 0.0
    %434 = vmatpush2.msra.mxu0 0.0
    %435 = vmatprep.subr.mxu0 0.0
    %436 = vmatpush2.msra.mxu0 0.0
    %437 = vmatprep.subr.mxu0 0.0
    %438 = vmatpush2.msra.mxu0 0.0
    %439 = vmatprep.subr.mxu0 0.0
    %440 = vmatpush2.msra.mxu0 0.0
    %441 = vmatprep.mubr.f32.mxu0 0.0
    %442 = vmatmul.mubr.f32.gmra.mxu0 %v97
    %v443 = vpop.f32.mrf.mxu0
    %v444 = vadd.f32 0.0, %v443
    %v445 = vpop.f32.mrf.mxu0
    %446 = vmatprep.mubr.f32.mxu0 0.0
    %447 = vmatmul.mubr.f32.gmra.mxu0 %v100
    %v448 = vpop.f32.mrf.mxu0
    %v449 = vadd.f32 0.0, %v448
    %v450 = vpop.f32.mrf.mxu0
    %451 = vmatprep.mubr.f32.mxu0 0.0
    %452 = vmatmul.mubr.f32.gmra.mxu0 %v103
    %v453 = vpop.f32.mrf.mxu0
    %v454 = vadd.f32 0.0, %v453
    %v455 = vpop.f32.mrf.mxu0
    %456 = vmatprep.mubr.f32.mxu0 0.0
    %457 = vmatmul.mubr.f32.gmra.mxu0 %v106
    %v458 = vpop.f32.mrf.mxu0
    %v459 = vadd.f32 0.0, %v458
    %v460 = vpop.f32.mrf.mxu0
    %461 = vmatprep.mubr.f32.mxu0 0.0
    %462 = vmatmul.mubr.f32.gmra.mxu0 %v109
    %v463 = vpop.f32.mrf.mxu0
    %v464 = vadd.f32 0.0, %v463
    %v465 = vpop.f32.mrf.mxu0
    %466 = vmatprep.mubr.f32.mxu0 0.0
    %467 = vmatmul.mubr.f32.gmra.mxu0 %v112
    %v468 = vpop.f32.mrf.mxu0
    %v469 = vadd.f32 0.0, %v468
    %v470 = vpop.f32.mrf.mxu0
    %471 = vmatprep.mubr.f32.mxu0 0.0
    %472 = vmatmul.mubr.f32.gmra.mxu0 %v115
    %v473 = vpop.f32.mrf.mxu0
    %v474 = vadd.f32 0.0, %v473
    %v475 = vpop.f32.mrf.mxu0
    %476 = vmatprep.mubr.f32.mxu0 0.0
    %477 = vmatmul.mubr.f32.gmra.mxu0 %v118
    %v478 = vpop.f32.mrf.mxu0
    %v479 = vadd.f32 0.0, %v478
    %v480 = vpop.f32.mrf.mxu0
    %481 = vdwg.mxu0
    %v482 = vld [vmem:[#allocation8] sm:$0xff]
    %v483 = vld [vmem:[#allocation8 + $0x8] sm:$0xff]
    %v484 = vld [vmem:[#allocation8 + $0x10] sm:$0xff]
    %v485 = vld [vmem:[#allocation8 + $0x18] sm:$0xff]
    %v486 = vld [vmem:[#allocation8 + $0x20] sm:$0xff]
    %v487 = vld [vmem:[#allocation8 + $0x28] sm:$0xff]
    %v488 = vld [vmem:[#allocation8 + $0x30] sm:$0xff]
    %v489 = vld [vmem:[#allocation8 + $0x38] sm:$0xff]
    %v490 = vld [vmem:[#allocation8 + $0x40] sm:$0xff]
    %v491 = vld [vmem:[#allocation8 + $0x48] sm:$0xff]
    %v492 = vld [vmem:[#allocation8 + $0x50] sm:$0xff]
    %v493 = vld [vmem:[#allocation8 + $0x58] sm:$0xff]
    %v494 = vld [vmem:[#allocation8 + $0x60] sm:$0xff]
    %v495 = vld [vmem:[#allocation8 + $0x68] sm:$0xff]
    %v496 = vld [vmem:[#allocation8 + $0x70] sm:$0xff]
    %v497 = vld [vmem:[#allocation8 + $0x78] sm:$0xff]
    %v498 = vld [vmem:[#allocation8 + $0x80] sm:$0xff]
    %v499 = vld [vmem:[#allocation8 + $0x88] sm:$0xff]
    %v500 = vld [vmem:[#allocation8 + $0x90] sm:$0xff]
    %v501 = vld [vmem:[#allocation8 + $0x98] sm:$0xff]
    %v502 = vld [vmem:[#allocation8 + $0xa0] sm:$0xff]
    %v503 = vld [vmem:[#allocation8 + $0xa8] sm:$0xff]
    %v504 = vld [vmem:[#allocation8 + $0xb0] sm:$0xff]
    %v505 = vld [vmem:[#allocation8 + $0xb8] sm:$0xff]
    %v506 = vld [vmem:[#allocation8 + $0xc0] sm:$0xff]
    %v507 = vld [vmem:[#allocation8 + $0xc8] sm:$0xff]
    %v508 = vld [vmem:[#allocation8 + $0xd0] sm:$0xff]
    %v509 = vld [vmem:[#allocation8 + $0xd8] sm:$0xff]
    %v510 = vld [vmem:[#allocation8 + $0xe0] sm:$0xff]
    %v511 = vld [vmem:[#allocation8 + $0xe8] sm:$0xff]
    %v512 = vld [vmem:[#allocation8 + $0xf0] sm:$0xff]
    %v513 = vld [vmem:[#allocation8 + $0xf8] sm:$0xff]
    %v514 = vld [vmem:[%s5] sm:$0x1]
    %v516 = vlaneseq
    %v517 = vshrl.u32 %v516, 7
    %v518 = vsub.s32 0, %v517
    %v519 = vrot.slane %v514, %v518
    %521 = vmatprep.subr.mxu0 0.0
    %522 = vmatpush1.msra.mxu0 %v497
    %523 = vmatprep.subr.mxu0 0.0
    %524 = vmatpush1.msra.mxu0 %v496
    %525 = vmatprep.subr.mxu0 0.0
    %526 = vmatpush1.msra.mxu0 %v495
    %527 = vmatprep.subr.mxu0 0.0
    %528 = vmatpush1.msra.mxu0 %v494
    %529 = vmatprep.subr.mxu0 0.0
    %530 = vmatpush1.msra.mxu0 %v493
    %531 = vmatprep.subr.mxu0 0.0
    %532 = vmatpush1.msra.mxu0 %v492
    %533 = vmatprep.subr.mxu0 0.0
    %534 = vmatpush1.msra.mxu0 %v491
    %535 = vmatprep.subr.mxu0 0.0
    %536 = vmatpush1.msra.mxu0 %v490
    %537 = vmatprep.subr.mxu0 0.0
    %538 = vmatpush1.msra.mxu0 %v489
    %539 = vmatprep.subr.mxu0 0.0
    %540 = vmatpush1.msra.mxu0 %v488
    %541 = vmatprep.subr.mxu0 0.0
    %542 = vmatpush1.msra.mxu0 %v487
    %543 = vmatprep.subr.mxu0 0.0
    %544 = vmatpush1.msra.mxu0 %v486
    %545 = vmatprep.subr.mxu0 0.0
    %546 = vmatpush1.msra.mxu0 %v485
    %547 = vmatprep.subr.mxu0 0.0
    %548 = vmatpush1.msra.mxu0 %v484
    %549 = vmatprep.subr.mxu0 0.0
    %550 = vmatpush1.msra.mxu0 %v483
    %551 = vmatprep.subr.mxu0 0.0
    %552 = vmatpush1.msra.mxu0 %v482
    %553 = vmatprep.subr.mxu0 0.0
    %554 = vmatpush2.msra.mxu0 %v513
    %555 = vmatprep.subr.mxu0 0.0
    %556 = vmatpush2.msra.mxu0 %v512
    %557 = vmatprep.subr.mxu0 0.0
    %558 = vmatpush2.msra.mxu0 %v511
    %559 = vmatprep.subr.mxu0 0.0
    %560 = vmatpush2.msra.mxu0 %v510
    %561 = vmatprep.subr.mxu0 0.0
    %562 = vmatpush2.msra.mxu0 %v509
    %563 = vmatprep.subr.mxu0 0.0
    %564 = vmatpush2.msra.mxu0 %v508
    %565 = vmatprep.subr.mxu0 0.0
    %566 = vmatpush2.msra.mxu0 %v507
    %567 = vmatprep.subr.mxu0 0.0
    %568 = vmatpush2.msra.mxu0 %v506
    %569 = vmatprep.subr.mxu0 0.0
    %570 = vmatpush2.msra.mxu0 %v505
    %571 = vmatprep.subr.mxu0 0.0
    %572 = vmatpush2.msra.mxu0 %v504
    %573 = vmatprep.subr.mxu0 0.0
    %574 = vmatpush2.msra.mxu0 %v503
    %575 = vmatprep.subr.mxu0 0.0
    %576 = vmatpush2.msra.mxu0 %v502
    %577 = vmatprep.subr.mxu0 0.0
    %578 = vmatpush2.msra.mxu0 %v501
    %579 = vmatprep.subr.mxu0 0.0
    %580 = vmatpush2.msra.mxu0 %v500
    %581 = vmatprep.subr.mxu0 0.0
    %582 = vmatpush2.msra.mxu0 %v499
    %583 = vmatprep.subr.mxu0 0.0
    %584 = vmatpush2.msra.mxu0 %v498
    %585 = vmatprep.mubr.f32.mxu0 %v369
    %586 = vmatmul.mubr.f32.gmra.mxu0 %v444
    %v587 = vpop.f32.mrf.mxu0
    %v588 = vadd.f32 %v519, %v587
    %v589 = vpop.f32.mrf.mxu0
    %590 = vmatprep.mubr.f32.mxu0 %v370
    %591 = vmatmul.mubr.f32.gmra.mxu0 %v449
    %v592 = vpop.f32.mrf.mxu0
    %v593 = vadd.f32 %v519, %v592
    %v594 = vpop.f32.mrf.mxu0
    %595 = vmatprep.mubr.f32.mxu0 %v371
    %596 = vmatmul.mubr.f32.gmra.mxu0 %v454
    %v597 = vpop.f32.mrf.mxu0
    %v598 = vadd.f32 %v519, %v597
    %v599 = vpop.f32.mrf.mxu0
    %600 = vmatprep.mubr.f32.mxu0 %v372
    %601 = vmatmul.mubr.f32.gmra.mxu0 %v459
    %v602 = vpop.f32.mrf.mxu0
    %v603 = vadd.f32 %v519, %v602
    %v604 = vpop.f32.mrf.mxu0
    %605 = vmatprep.mubr.f32.mxu0 %v373
    %606 = vmatmul.mubr.f32.gmra.mxu0 %v464
    %v607 = vpop.f32.mrf.mxu0
    %v608 = vadd.f32 %v519, %v607
    %v609 = vpop.f32.mrf.mxu0
    %610 = vmatprep.mubr.f32.mxu0 %v374
    %611 = vmatmul.mubr.f32.gmra.mxu0 %v469
    %v612 = vpop.f32.mrf.mxu0
    %v613 = vadd.f32 %v519, %v612
    %v614 = vpop.f32.mrf.mxu0
    %615 = vmatprep.mubr.f32.mxu0 %v375
    %616 = vmatmul.mubr.f32.gmra.mxu0 %v474
    %v617 = vpop.f32.mrf.mxu0
    %v618 = vadd.f32 %v519, %v617
    %v619 = vpop.f32.mrf.mxu0
    %620 = vmatprep.mubr.f32.mxu0 %v376
    %621 = vmatmul.mubr.f32.gmra.mxu0 %v479
    %v622 = vpop.f32.mrf.mxu0
    %v623 = vadd.f32 %v519, %v622
    %v624 = vpop.f32.mrf.mxu0
    %625 = vdwg.mxu0
    %626 = vst [vmem:[#allocation10] sm:$0xff] %v588
    %627 = vst [vmem:[#allocation10 + $0x8] sm:$0xff] %v593
    %628 = vst [vmem:[#allocation10 + $0x10] sm:$0xff] %v598
    %629 = vst [vmem:[#allocation10 + $0x18] sm:$0xff] %v603
    %630 = vst [vmem:[#allocation10 + $0x20] sm:$0xff] %v608
    %631 = vst [vmem:[#allocation10 + $0x28] sm:$0xff] %v613
    %632 = vst [vmem:[#allocation10 + $0x30] sm:$0xff] %v618
    %633 = vst [vmem:[#allocation10 + $0x38] sm:$0xff] %v623
    // Predicated region
    $region42: #{tpu_custom_call.1} parent=1 // pred_check
      _
    $region43: #{tpu_custom_call.1} parent=1 // pred_check_branch
      %635 = sbr.rel (0) target = $region45
    $region44: #{tpu_custom_call.1} parent=1 // pred_region
      %s637 = ssub.s32 1024, 1024
      %638 = vsyncadd [#allocation4], %s637
      %s639 = sshll.u32 [#allocation10], 4
      %s640 = int_to_ptr.vmem [resolvable:$true] %s639
      %645 = dma.vmem_to_hbm [thread:$0]  %s640, 1024, %s6, [#allocation4], 128, 128, 8
    $region45: #{tpu_custom_call.1} parent=1 // pred_fallthru
      _
    // Predicated region
    $region46: #{tpu_custom_call.1} parent=1 // pred_check
      _
    $region47: #{tpu_custom_call.1} parent=1 // pred_check_branch
      %647 = sbr.rel (0) target = $region49
    $region48: #{tpu_custom_call.1} parent=1 // pred_region
      %648 = dma.done [#allocation4], 1024
    $region49: #{tpu_custom_call.1} parent=1 // pred_fallthru
      _
    %649 = vsyncpa [#allocation3], 1
    %650 = vsyncpa [#allocation6], 1
    %651 = vsyncpa [#allocation9], 1
    %652 = vsyncpa [#allocation4], 1

</llo_original>
